<compile_context>
chip_gen: v7x
topology: tpu7x:2x2x1
jax: 0.10.0
libtpu: 0.0.40
codegen_flags: <defaults>
</compile_context>

<pallas_src>
import jax
import jax.numpy as jnp
import numpy as np
from jax.experimental import pallas as pl
from jax.experimental.pallas import tpu as pltpu


# ----------------------------- Pallas kernel --------------------------------
def convlstm_kernel(xh_ref, cx_ref, w_ref, out_ref):
    """One M-tile of the fused ConvLSTM cell (M = B*Ho*Wo on the lane axis).

    xh_ref  : (K_pad, TM)      bf16   [im2col(x) ; hx ; ones(bias row)] K-major
    cx_ref  : (Chid, TM)       f32
    w_ref   : (4*Chid, K_pad)  bf16   [W_ih ; W_hh ; b_ih+b_hh] fused,
                                      i/f/o gate rows pre-scaled by 0.5
    out_ref : (2*Chid, TM)     f32    rows [0:Chid) = hy, [Chid:2*Chid) = cy
    """
    # Single fused MXU matmul (bias folded into the padded K row), f32 accum.
    gates = jnp.dot(w_ref[...], xh_ref[...], preferred_element_type=jnp.float32)

    # ONE EUP push over the whole gate block.  i/f/o rows were pre-scaled by
    # 0.5 in the weights, so sigmoid(x) = 0.5*tanh(0.5*x) + 0.5 reduces to a
    # per-row affine of this single tanh; g rows are tanh(x) directly.
    t = jnp.tanh(gates)

    hc = cx_ref.shape[0]                               # hidden_channels (static)
    ingate     = 0.5 * t[0 * hc:1 * hc, :] + 0.5
    forgetgate = 0.5 * t[1 * hc:2 * hc, :] + 0.5
    cellgate   = t[2 * hc:3 * hc, :]
    outgate    = 0.5 * t[3 * hc:4 * hc, :] + 0.5

    cy = forgetgate * cx_ref[...] + ingate * cellgate   # all-f32 VPU math
    hy = outgate * jnp.tanh(cy)

    out_ref[0:hc, :]      = hy                           # lane-dense stores,
    out_ref[hc:2 * hc, :] = cy                           # sublane-aligned halves


# --------------------------------- glue --------------------------------------
def _round_up(a, b):
    return (a + b - 1) // b * b


def _cdiv(a, b):
    return -(-a // b)


_STEP_TRAFFIC_TARGET = 1 << 20          # ~1 MiB of HBM traffic per grid step


def _vmem_plan():
    """Per-generation VMEM plan: (scoped_limit_bytes, tile_buffer_budget_bytes)."""
    try:  # trace-time HW query; fall back conservatively (v7x per-TC VMEM).
        phys = int(pltpu.get_tpu_info().vmem_capacity_bytes)
    except Exception:
        phys = 64 << 20
    scoped = min(phys // 2, 32 << 20)    # 32 MiB on v5e/v6e/v7x
    return scoped, scoped // 2           # tile double-buffers get half of it


def _pick_tile_m(m, hbm_bytes_per_col, vmem_bytes_per_col, vmem_tile_budget):
    """Lane-dim (M) tile: multiple of 128, sized so each grid step moves ~1 MiB
    of HBM traffic, capped by the double-buffered VMEM budget, while keeping
    >=4 grid steps (2 per v7x TensorCore) whenever each step can still carry
    >= ~0.5 MiB of traffic."""
    m128 = _round_up(max(m, 1), 128)
    tm = _round_up(_cdiv(_STEP_TRAFFIC_TARGET, hbm_bytes_per_col), 128)
    tm_vmem = max((vmem_tile_budget // vmem_bytes_per_col) // 128 * 128, 128)
    tm = min(tm, tm_vmem, m128)
    half_tm = _round_up(_cdiv(_STEP_TRAFFIC_TARGET // 2, hbm_bytes_per_col), 128)
    if m128 >= 4 * half_tm:                       # problem big enough: keep >=4 steps
        tm = min(tm, _round_up(_cdiv(m, 4), 128))
    return max(tm, 128)


def _im2col_valid_kmajor(x, kh, kw):
    """x: (B, C, H, W) NCHW -> (C*kh*kw, B*Ho*Wo) K-major, 'VALID', stride 1."""
    B, C, H, W = x.shape
    Ho, Wo = H - kh + 1, W - kw + 1
    cols = []
    for c in range(C):                 # column order matches w_ih.reshape(.., C*kh*kw)
        for ky in range(kh):
            for kx in range(kw):
                cols.append(x[:, c, ky:ky + Ho, kx:kx + Wo])
    patches = jnp.stack(cols, axis=0)                  # (C*kh*kw, B, Ho, Wo)
    return patches.reshape(C * kh * kw, B * Ho * Wo), (Ho, Wo)


@jax.jit
def conv_lstm_cell(x, hx, cx, w_ih, b_ih, w_hh, b_hh):
    """Forward of ConvLSTMCell (kernel=3, stride=1, pad=0, hidden_kernel=1).

    x  : (B, Cin, H, W)          NCHW
    hx, cx : (B, Chid, Ho, Wo)   NCHW with Ho = H-2, Wo = W-2
    w_ih : (4*Chid, Cin, 3, 3)   b_ih : (4*Chid,)
    w_hh : (4*Chid, Chid, 1, 1)  b_hh : (4*Chid,)
    returns (hy, cy) each (B, Chid, Ho, Wo); cy stays f32.
    """
    B, Cin, H, W = x.shape
    Chid = hx.shape[1]
    kh, kw = int(w_ih.shape[2]), int(w_ih.shape[3])
    Ho, Wo = H - kh + 1, W - kw + 1
    M = B * Ho * Wo

    # K-major im2col / hidden-state / bias-row operands (no wrapper .T passes).
    patches_km, _ = _im2col_valid_kmajor(x, kh, kw)                 # (Cin*kh*kw, M)
    hx_km = jnp.transpose(hx, (1, 0, 2, 3)).reshape(Chid, M)        # (Chid, M)
    cx_km = jnp.transpose(cx, (1, 0, 2, 3)).reshape(Chid, M)        # (Chid, M)
    ones_row = jnp.ones((1, M), patches_km.dtype)                   # bias row

    K_in = Cin * kh * kw
    K_bias = K_in + Chid + 1                    # fused contraction dim incl. bias row
    K_pad = _round_up(K_bias, 16)               # bf16 packs 16 rows / sublane group

    # Tile sizing (traffic-target + per-generation VMEM budget).
    scoped_vmem, tile_budget = _vmem_plan()
    hbm_bytes_per_col = 2 * K_pad + 4 * Chid + 4 * 2 * Chid   # xh(bf16)+cx(f32)+out(f32)
    vmem_bytes_per_col = 2 * hbm_bytes_per_col                # double-buffered tiles
    w_vmem_bytes = 2 * (4 * Chid * K_pad * 2)                 # resident weights (x2 bufs)
    TM = _pick_tile_m(M, hbm_bytes_per_col, vmem_bytes_per_col,
                      max(tile_budget - w_vmem_bytes, 1 << 20))
    M_pad = _round_up(M, TM)

    # xh operand: [im2col ; hx ; 1] K-major, bf16, zero-padded in K and M.
    xh = jnp.concatenate([patches_km, hx_km, ones_row], axis=0).astype(jnp.bfloat16)
    xh_t = jnp.pad(xh, ((0, K_pad - K_bias), (0, M_pad - M)))       # (K_pad, M_pad)

    cx_t = jnp.pad(cx_km.astype(jnp.float32), ((0, 0), (0, M_pad - M)))  # (Chid, M_pad)

    # Fused weights [W_ih ; W_hh ; b_ih+b_hh]; i/f/o gate rows pre-scaled by 0.5
    # so the kernel needs a single tanh over the whole gate block.
    gate_scale = jnp.concatenate([jnp.full((Chid,), 0.5, jnp.float32),
                                  jnp.full((Chid,), 0.5, jnp.float32),
                                  jnp.ones((Chid,), jnp.float32),
                                  jnp.full((Chid,), 0.5, jnp.float32)])
    w_fused = jnp.concatenate(
        [w_ih.reshape(4 * Chid, K_in).astype(jnp.float32),
         w_hh.reshape(4 * Chid, Chid).astype(jnp.float32),
         (b_ih + b_hh).reshape(4 * Chid, 1).astype(jnp.float32)], axis=1)
    w_t = jnp.pad(w_fused * gate_scale[:, None],
                  ((0, 0), (0, K_pad - K_bias))).astype(jnp.bfloat16)   # (4*Chid, K_pad)

    grid = (M_pad // TM,)
    grid_spec = pltpu.PrefetchScalarGridSpec(
        num_scalar_prefetch=0,
        grid=grid,
        in_specs=[
            pl.BlockSpec((K_pad, TM), lambda i: (0, i)),         # xh      : tiled over M
            pl.BlockSpec((Chid, TM), lambda i: (0, i)),          # cx      : tiled over M
            pl.BlockSpec((4 * Chid, K_pad), lambda i: (0, 0)),   # weights : VMEM-resident
        ],
        out_specs=pl.BlockSpec((2 * Chid, TM), lambda i: (0, i)),
    )

    cost = pl.CostEstimate(
        flops=2 * (4 * Chid) * K_pad * M_pad,
        transcendentals=(4 * Chid + Chid) * M_pad,
        bytes_accessed=(xh_t.size * 2 + cx_t.size * 4 + w_t.size * 2
                        + 2 * Chid * M_pad * 4),
    )

    out_t = pl.pallas_call(
        convlstm_kernel,
        out_shape=jax.ShapeDtypeStruct((2 * Chid, M_pad), jnp.float32),  # cy stays f32
        grid_spec=grid_spec,
        compiler_params=pltpu.CompilerParams(
            dimension_semantics=("parallel",),
            vmem_limit_bytes=scoped_vmem),
        cost_estimate=cost,
    )(xh_t, cx_t, w_t)

    # Split fused output K-major first, drop M padding, then one small transpose
    # back to NCHW (no .T over the wide slab).
    hy = jnp.transpose(out_t[:Chid, :M].reshape(Chid, B, Ho, Wo),
                       (1, 0, 2, 3)).astype(hx.dtype)
    cy = jnp.transpose(out_t[Chid:2 * Chid, :M].reshape(Chid, B, Ho, Wo),
                       (1, 0, 2, 3))                                  # f32 cell state
    return hy, cy


# ----------------------------- reference (JAX) --------------------------------
def conv_lstm_cell_ref(x, hx, cx, w_ih, b_ih, w_hh, b_hh):
    dn = ("NCHW", "OIHW", "NCHW")
    gates = (
        jax.lax.conv_general_dilated(x, w_ih, (1, 1), "VALID", dimension_numbers=dn)
        + b_ih.reshape(1, -1, 1, 1)
        + jax.lax.conv_general_dilated(hx, w_hh, (1, 1), "VALID", dimension_numbers=dn)
        + b_hh.reshape(1, -1, 1, 1)
    )
    hc = hx.shape[1]
    i, f, g, o = (gates[:, k * hc:(k + 1) * hc] for k in range(4))
    i, f, g, o = jax.nn.sigmoid(i), jax.nn.sigmoid(f), jnp.tanh(g), jax.nn.sigmoid(o)
    cy = f * cx + i * g
    hy = o * jnp.tanh(cy)
    return hy, cy


# ----------------------------------- main -------------------------------------
if __name__ == "__main__":
    B, Cin, H, W = 2, 4, 16, 16
    Chid = 8
    kh = kw = 3                      # kernel_size=3, padding=0, stride=1
    Ho, Wo = H - kh + 1, W - kw + 1  # hidden spatial must match conv_ih output

    key = jax.random.PRNGKey(0)
    kx, kh0, kc0, kw1, kb1, kw2, kb2 = jax.random.split(key, 7)

    x  = jax.random.normal(kx,  (B, Cin, H, W),  dtype=jnp.float32)
    hx = jax.random.normal(kh0, (B, Chid, Ho, Wo), dtype=jnp.float32)
    cx = jax.random.normal(kc0, (B, Chid, Ho, Wo), dtype=jnp.float32)

    # Deterministic parameter init (PyTorch-style uniform bounds).
    fan_ih = Cin * kh * kw
    fan_hh = Chid * 1 * 1
    bound_ih = 1.0 / np.sqrt(fan_ih)
    bound_hh = 1.0 / np.sqrt(fan_hh)
    w_ih = jax.random.uniform(kw1, (4 * Chid, Cin, kh, kw), jnp.float32,
                              -bound_ih, bound_ih)
    b_ih = jax.random.uniform(kb1, (4 * Chid,), jnp.float32, -bound_ih, bound_ih)
    w_hh = jax.random.uniform(kw2, (4 * Chid, Chid, 1, 1), jnp.float32,
                              -bound_hh, bound_hh)
    b_hh = jax.random.uniform(kb2, (4 * Chid,), jnp.float32, -bound_hh, bound_hh)

    hy, cy = conv_lstm_cell(x, hx, cx, w_ih, b_ih, w_hh, b_hh)
    hy, cy = jax.block_until_ready((hy, cy))

    hy_ref, cy_ref = conv_lstm_cell_ref(x, hx, cx, w_ih, b_ih, w_hh, b_hh)
    # MXU operands are bf16 (f32 accumulation) -> relaxed tolerance.
    np.testing.assert_allclose(np.asarray(hy), np.asarray(hy_ref), rtol=2e-2, atol=2e-2)
    np.testing.assert_allclose(np.asarray(cy), np.asarray(cy_ref), rtol=2e-2, atol=2e-2)

    print("KERNEL_OK")
</pallas_src>

<mosaic_0001>
module attributes {stable_mosaic.version = 11 : i64} {
  func.func @convlstm_kernel(%arg0: i32, %arg1: memref<48x512xbf16, #tpu.memory_space<vmem>>, %arg2: memref<8x512xf32, #tpu.memory_space<vmem>>, %arg3: memref<32x48xbf16, #tpu.memory_space<vmem>>, %arg4: memref<16x512xf32, #tpu.memory_space<vmem>>) attributes {dimension_semantics = [#tpu.dimension_semantics<parallel>], iteration_bounds = array<i64: 1>, scalar_prefetch = 0 : i64, scratch_operands = 0 : i64, tpu.core_type = #tpu.core_type<tc>, window_params = [{transform_indices = @transform_0, window_bounds = array<i64: 48, 512>}, {transform_indices = @transform_1, window_bounds = array<i64: 8, 512>}, {pipeline_mode = #tpu.pipeline_mode<synchronous>, transform_indices = @transform_2, window_bounds = array<i64: 32, 48>}, {transform_indices = @transform_3, window_bounds = array<i64: 16, 512>}]} {
    %c0 = arith.constant 0 : index
    %c0_0 = arith.constant 0 : index
    %0 = vector.load %arg3[%c0, %c0_0] : memref<32x48xbf16, #tpu.memory_space<vmem>>, vector<32x48xbf16>
    %c0_1 = arith.constant 0 : index
    %c0_2 = arith.constant 0 : index
    %1 = vector.load %arg1[%c0_1, %c0_2] : memref<48x512xbf16, #tpu.memory_space<vmem>>, vector<48x512xbf16>
    %cst = arith.constant dense<0.000000e+00> : vector<32x512xf32>
    %2 = tpu.matmul %0, %1, %cst {dimension_numbers = #tpu.dot_dimension_numbers<[1], [0], [0], [1], [0, 0, 1, 1], [], []>} : vector<32x48xbf16>, vector<48x512xbf16>, vector<32x512xf32> -> vector<32x512xf32>
    %3 = math.tanh %2 : vector<32x512xf32>
    %4 = vector.extract_strided_slice %3 {offsets = [0, 0], sizes = [8, 512], strides = [1, 1]} : vector<32x512xf32> to vector<8x512xf32>
    %cst_3 = arith.constant 5.000000e-01 : f32
    %5 = vector.broadcast %cst_3 : f32 to vector<8x512xf32>
    %6 = arith.mulf %5, %4 : vector<8x512xf32>
    %cst_4 = arith.constant 5.000000e-01 : f32
    %7 = vector.broadcast %cst_4 : f32 to vector<8x512xf32>
    %8 = arith.addf %6, %7 : vector<8x512xf32>
    %9 = vector.extract_strided_slice %3 {offsets = [8, 0], sizes = [8, 512], strides = [1, 1]} : vector<32x512xf32> to vector<8x512xf32>
    %cst_5 = arith.constant 5.000000e-01 : f32
    %10 = vector.broadcast %cst_5 : f32 to vector<8x512xf32>
    %11 = arith.mulf %10, %9 : vector<8x512xf32>
    %cst_6 = arith.constant 5.000000e-01 : f32
    %12 = vector.broadcast %cst_6 : f32 to vector<8x512xf32>
    %13 = arith.addf %11, %12 : vector<8x512xf32>
    %14 = vector.extract_strided_slice %3 {offsets = [16, 0], sizes = [8, 512], strides = [1, 1]} : vector<32x512xf32> to vector<8x512xf32>
    %15 = vector.extract_strided_slice %3 {offsets = [24, 0], sizes = [8, 512], strides = [1, 1]} : vector<32x512xf32> to vector<8x512xf32>
    %cst_7 = arith.constant 5.000000e-01 : f32
    %16 = vector.broadcast %cst_7 : f32 to vector<8x512xf32>
    %17 = arith.mulf %16, %15 : vector<8x512xf32>
    %cst_8 = arith.constant 5.000000e-01 : f32
    %18 = vector.broadcast %cst_8 : f32 to vector<8x512xf32>
    %19 = arith.addf %17, %18 : vector<8x512xf32>
    %c0_9 = arith.constant 0 : index
    %c0_10 = arith.constant 0 : index
    %20 = vector.load %arg2[%c0_9, %c0_10] : memref<8x512xf32, #tpu.memory_space<vmem>>, vector<8x512xf32>
    %21 = arith.mulf %13, %20 : vector<8x512xf32>
    %22 = arith.mulf %8, %14 : vector<8x512xf32>
    %23 = arith.addf %21, %22 : vector<8x512xf32>
    %24 = math.tanh %23 : vector<8x512xf32>
    %25 = arith.mulf %19, %24 : vector<8x512xf32>
    %c0_11 = arith.constant 0 : index
    %c0_12 = arith.constant 0 : index
    %26 = vector.load %arg4[%c0_11, %c0_12] : memref<16x512xf32, #tpu.memory_space<vmem>>, vector<8x512xf32>
    tpu.vector_store %arg4[%c0_11, %c0_12], %25 {strides = array<i32>} : memref<16x512xf32, #tpu.memory_space<vmem>>, vector<8x512xf32>,
    %c8 = arith.constant 8 : index
    %c0_13 = arith.constant 0 : index
    %27 = vector.load %arg4[%c8, %c0_13] : memref<16x512xf32, #tpu.memory_space<vmem>>, vector<8x512xf32>
    tpu.vector_store %arg4[%c8, %c0_13], %23 {strides = array<i32>} : memref<16x512xf32, #tpu.memory_space<vmem>>, vector<8x512xf32>,
    return
  }
  func.func @transform_0(%arg0: i32) -> (i32, i32) {
    %c0_i32 = arith.constant 0 : i32
    %c0_i32_0 = arith.constant 0 : i32
    return %c0_i32, %arg0 : i32, i32
  }
  func.func @transform_1(%arg0: i32) -> (i32, i32) {
    %c0_i32 = arith.constant 0 : i32
    %c0_i32_0 = arith.constant 0 : i32
    return %c0_i32, %arg0 : i32, i32
  }
  func.func @transform_2(%arg0: i32) -> (i32, i32) {
    %c0_i32 = arith.constant 0 : i32
    %c0_i32_0 = arith.constant 0 : i32
    %c0_i32_1 = arith.constant 0 : i32
    return %c0_i32, %c0_i32_0 : i32, i32
  }
  func.func @transform_3(%arg0: i32) -> (i32, i32) {
    %c0_i32 = arith.constant 0 : i32
    %c0_i32_0 = arith.constant 0 : i32
    return %c0_i32, %arg0 : i32, i32
  }
}

</mosaic_0001>

<llo_original>
// kernel: conv_lstm_cell.1
$region0: #{conv_lstm_cell.1}
  #allocation0 [shape = 'u32[]', space=smem, size = 0x4, offset = 0x4, fixed_abs, tag = 'smem constant byte address 0x4 - core index']
  #allocation1 [shape = 'u32[144,128]{1,0:T(1,128)}', space=vmem, size = 0x12000, scoped, tag = 'internal scratch']
  %s0 = inlined_call_operand.vmem [shape: bf16[48,512], index: 0, kind: input, shape index: {}]
  %s1 = inlined_call_operand.vmem [shape: f32[8,512], index: 1, kind: input, shape index: {}]
  %s2 = inlined_call_operand.vmem [shape: bf16[32,48], index: 2, kind: input, shape index: {}]
  %s3 = inlined_call_operand.vmem [shape: f32[16,512], index: 3, kind: output, shape index: {}]
  %s4 = sld [smem:[#allocation0]]
  $region22: #{conv_lstm_cell.1} parent=0
    _
  %s6 = ssub.s32 1, %s4
  %s7 = scalar_select 0, %s6, %s4
  // Predicated region
  $region2: #{conv_lstm_cell.1} parent=0 // pred_check
    _
  $region3: #{conv_lstm_cell.1} parent=0 // pred_check_branch
    %9 = sbr.rel (0) target = $region5
  $region4: #{conv_lstm_cell.1} parent=0 // pred_region
    _
  $region5: #{conv_lstm_cell.1} parent=0 // pred_fallthru
    _
  // Predicated region
  $region6: #{conv_lstm_cell.1} parent=0 // pred_check
    _
  $region7: #{conv_lstm_cell.1} parent=0 // pred_check_branch
    %11 = sbr.rel (0) target = $region9
  $region8: #{conv_lstm_cell.1} parent=0 // pred_region
    _
  $region9: #{conv_lstm_cell.1} parent=0 // pred_fallthru
    _
  // Predicated region
  $region10: #{conv_lstm_cell.1} parent=0 // pred_check
    _
  $region11: #{conv_lstm_cell.1} parent=0 // pred_check_branch
    %13 = sbr.rel (0) target = $region13
  $region12: #{conv_lstm_cell.1} parent=0 // pred_region
    _
  $region13: #{conv_lstm_cell.1} parent=0 // pred_fallthru
    _
  %v15 = vld [vmem:[%s2] sm:$0xf]
  %v16 = vld [vmem:[%s2 + $0x4] sm:$0xf]
  %v17 = vld [vmem:[%s2 + $0x8] sm:$0xf]
  %v18 = vld [vmem:[%s2 + $0xc] sm:$0xf]
  %v19 = vld [vmem:[%s0] sm:$0xff]
  %v20 = vld [vmem:[%s0 + $0x8] sm:$0xff]
  %v21 = vld [vmem:[%s0 + $0x10] sm:$0xff]
  %v22 = vld [vmem:[%s0 + $0x18] sm:$0xff]
  %v23 = vld [vmem:[%s0 + $0x20] sm:$0xff]
  %v24 = vld [vmem:[%s0 + $0x28] sm:$0xff]
  %v25 = vld [vmem:[%s0 + $0x30] sm:$0xff]
  %v26 = vld [vmem:[%s0 + $0x38] sm:$0xff]
  %v27 = vld [vmem:[%s0 + $0x40] sm:$0xff]
  %v28 = vld [vmem:[%s0 + $0x48] sm:$0xff]
  %v29 = vld [vmem:[%s0 + $0x50] sm:$0xff]
  %v30 = vld [vmem:[%s0 + $0x58] sm:$0xff]
  %v35 = vunpack.c.l.b16 %v15
  %v36 = vunpack.c.l.b16 %v16
  %v37 = vunpack.c.l.b16 %v17
  %v38 = vunpack.c.l.b16 %v18
  %v39 = vpack.c.b16 %v36, %v35
  %v40 = vpack.c.b16 %v38, %v37
  %v53 = vunpack.c.l.b16 %v19
  %v54 = vunpack.c.h.b16 %v19
  %v55 = vunpack.c.l.b16 %v20
  %v56 = vunpack.c.h.b16 %v20
  %v57 = vunpack.c.l.b16 %v21
  %v58 = vunpack.c.h.b16 %v21
  %v59 = vunpack.c.l.b16 %v22
  %v60 = vunpack.c.h.b16 %v22
  %v61 = vunpack.c.l.b16 %v23
  %v62 = vunpack.c.h.b16 %v23
  %v63 = vunpack.c.l.b16 %v24
  %v64 = vunpack.c.h.b16 %v24
  %v65 = vunpack.c.l.b16 %v25
  %v66 = vunpack.c.h.b16 %v25
  %v67 = vunpack.c.l.b16 %v26
  %v68 = vunpack.c.h.b16 %v26
  %v69 = vunpack.c.l.b16 %v27
  %v70 = vunpack.c.h.b16 %v27
  %v71 = vunpack.c.l.b16 %v28
  %v72 = vunpack.c.h.b16 %v28
  %v73 = vunpack.c.l.b16 %v29
  %v74 = vunpack.c.h.b16 %v29
  %v75 = vunpack.c.l.b16 %v30
  %v76 = vunpack.c.h.b16 %v30
  %v77 = vpack.c.b16 %v57, %v53
  %v78 = vpack.c.b16 %v58, %v54
  %v79 = vpack.c.b16 %v59, %v55
  %v80 = vpack.c.b16 %v60, %v56
  %v81 = vpack.c.b16 %v65, %v61
  %v82 = vpack.c.b16 %v66, %v62
  %v83 = vpack.c.b16 %v67, %v63
  %v84 = vpack.c.b16 %v68, %v64
  %v85 = vpack.c.b16 %v73, %v69
  %v86 = vpack.c.b16 %v74, %v70
  %v87 = vpack.c.b16 %v75, %v71
  %v88 = vpack.c.b16 %v76, %v72
  %vm101 = vcmask 392192
  %v103 = vsel %vm101, %v39, 0
  %v106 = vsel %vm101, %v40, 0
  %108 = vmatprep.subr.bf16.mxu0 %v78
  %109 = vmatpush1.bf16.msra.mxu0 %v77
  %110 = vmatprep.subr.bf16.mxu0 %v82
  %111 = vmatpush1.bf16.msra.mxu0 %v81
  %112 = vmatprep.subr.bf16.mxu0 %v86
  %113 = vmatpush1.bf16.msra.mxu0 %v85
  %114 = vmatprep.subr.bf16.mxu0 0
  %115 = vmatpush1.bf16.msra.mxu0 0
  %116 = vmatprep.subr.bf16.mxu0 0
  %117 = vmatpush1.bf16.msra.mxu0 0
  %118 = vmatprep.subr.bf16.mxu0 0
  %119 = vmatpush1.bf16.msra.mxu0 0
  %120 = vmatprep.subr.bf16.mxu0 0
  %121 = vmatpush1.bf16.msra.mxu0 0
  %122 = vmatprep.subr.bf16.mxu0 0
  %123 = vmatpush1.bf16.msra.mxu0 0
  %124 = vmatprep.subr.bf16.mxu0 0
  %125 = vmatpush1.bf16.msra.mxu0 0
  %126 = vmatprep.subr.bf16.mxu0 0
  %127 = vmatpush1.bf16.msra.mxu0 0
  %128 = vmatprep.subr.bf16.mxu0 0
  %129 = vmatpush1.bf16.msra.mxu0 0
  %130 = vmatprep.subr.bf16.mxu0 0
  %131 = vmatpush1.bf16.msra.mxu0 0
  %132 = vmatprep.subr.bf16.mxu0 0
  %133 = vmatpush1.bf16.msra.mxu0 0
  %134 = vmatprep.subr.bf16.mxu0 0
  %135 = vmatpush1.bf16.msra.mxu0 0
  %136 = vmatprep.subr.bf16.mxu0 0
  %137 = vmatpush1.bf16.msra.mxu0 0
  %138 = vmatprep.subr.bf16.mxu0 0
  %139 = vmatpush1.bf16.msra.mxu0 0
  %140 = vmatprep.mubr.bf16.mxu0 0
  %141 = vmatmul.mubr.bf16.gmra.mrb[0].mxu0 %v103
  %v142 = vpop.f32.mrb[0].mxu0
  %v143 = vadd.f32 0.0, %v142
  %v144 = vpop.f32.mrb[0].mxu0
  %v145 = vadd.f32 0.0, %v144
  %v146 = vpop.f32.mrb[0].mxu0
  %v147 = vadd.f32 0.0, %v146
  %v148 = vpop.f32.mrb[0].mxu0
  %v149 = vadd.f32 0.0, %v148
  %150 = vmatprep.mubr.bf16.mxu0 0
  %151 = vmatmul.mubr.bf16.gmra.mrb[0].mxu0 %v106
  %v152 = vpop.f32.mrb[0].mxu0
  %v153 = vadd.f32 0.0, %v152
  %v154 = vpop.f32.mrb[0].mxu0
  %v155 = vadd.f32 0.0, %v154
  %v156 = vpop.f32.mrb[0].mxu0
  %v157 = vadd.f32 0.0, %v156
  %v158 = vpop.f32.mrb[0].mxu0
  %v159 = vadd.f32 0.0, %v158
  %160 = vdwg.mxu0
  %161 = vmatprep.subr.bf16.mxu0 %v80
  %162 = vmatpush1.bf16.msra.mxu0 %v79
  %163 = vmatprep.subr.bf16.mxu0 %v84
  %164 = vmatpush1.bf16.msra.mxu0 %v83
  %165 = vmatprep.subr.bf16.mxu0 %v88
  %166 = vmatpush1.bf16.msra.mxu0 %v87
  %167 = vmatprep.subr.bf16.mxu0 0
  %168 = vmatpush1.bf16.msra.mxu0 0
  %169 = vmatprep.subr.bf16.mxu0 0
  %170 = vmatpush1.bf16.msra.mxu0 0
  %171 = vmatprep.subr.bf16.mxu0 0
  %172 = vmatpush1.bf16.msra.mxu0 0
  %173 = vmatprep.subr.bf16.mxu0 0
  %174 = vmatpush1.bf16.msra.mxu0 0
  %175 = vmatprep.subr.bf16.mxu0 0
  %176 = vmatpush1.bf16.msra.mxu0 0
  %177 = vmatprep.subr.bf16.mxu0 0
  %178 = vmatpush1.bf16.msra.mxu0 0
  %179 = vmatprep.subr.bf16.mxu0 0
  %180 = vmatpush1.bf16.msra.mxu0 0
  %181 = vmatprep.subr.bf16.mxu0 0
  %182 = vmatpush1.bf16.msra.mxu0 0
  %183 = vmatprep.subr.bf16.mxu0 0
  %184 = vmatpush1.bf16.msra.mxu0 0
  %185 = vmatprep.subr.bf16.mxu0 0
  %186 = vmatpush1.bf16.msra.mxu0 0
  %187 = vmatprep.subr.bf16.mxu0 0
  %188 = vmatpush1.bf16.msra.mxu0 0
  %189 = vmatprep.subr.bf16.mxu0 0
  %190 = vmatpush1.bf16.msra.mxu0 0
  %191 = vmatprep.subr.bf16.mxu0 0
  %192 = vmatpush1.bf16.msra.mxu0 0
  %193 = vmatprep.mubr.bf16.mxu0 0
  %194 = vmatmul.mubr.bf16.gmra.mrb[0].mxu0 %v103
  %v195 = vpop.f32.mrb[0].mxu0
  %v196 = vadd.f32 0.0, %v195
  %v197 = vpop.f32.mrb[0].mxu0
  %v198 = vadd.f32 0.0, %v197
  %v199 = vpop.f32.mrb[0].mxu0
  %v200 = vadd.f32 0.0, %v199
  %v201 = vpop.f32.mrb[0].mxu0
  %v202 = vadd.f32 0.0, %v201
  %203 = vmatprep.mubr.bf16.mxu0 0
  %204 = vmatmul.mubr.bf16.gmra.mrb[0].mxu0 %v106
  %v205 = vpop.f32.mrb[0].mxu0
  %v206 = vadd.f32 0.0, %v205
  %v207 = vpop.f32.mrb[0].mxu0
  %v208 = vadd.f32 0.0, %v207
  %v209 = vpop.f32.mrb[0].mxu0
  %v210 = vadd.f32 0.0, %v209
  %v211 = vpop.f32.mrb[0].mxu0
  %v212 = vadd.f32 0.0, %v211
  %213 = vdwg.mxu0
  %v214 = vtanh.pop %v143
  %v215 = vtanh.pop %v145
  %v216 = vtanh.pop %v196
  %v217 = vtanh.pop %v198
  %v218 = vtanh.pop %v147
  %v219 = vtanh.pop %v149
  %v220 = vtanh.pop %v200
  %v221 = vtanh.pop %v202
  %v222 = vtanh.pop %v153
  %v223 = vtanh.pop %v155
  %v224 = vtanh.pop %v206
  %v225 = vtanh.pop %v208
  %v226 = vtanh.pop %v157
  %v227 = vtanh.pop %v159
  %v228 = vtanh.pop %v210
  %v229 = vtanh.pop %v212
  %v230 = vmul.f32 %v214, 0.5
  %v231 = vmul.f32 %v215, 0.5
  %v232 = vmul.f32 %v216, 0.5
  %v233 = vmul.f32 %v217, 0.5
  %v234 = vadd.f32 %v230, 0.5
  %v235 = vadd.f32 %v231, 0.5
  %v236 = vadd.f32 %v232, 0.5
  %v237 = vadd.f32 %v233, 0.5
  %v238 = vmul.f32 %v218, 0.5
  %v239 = vmul.f32 %v219, 0.5
  %v240 = vmul.f32 %v220, 0.5
  %v241 = vmul.f32 %v221, 0.5
  %v242 = vadd.f32 %v238, 0.5
  %v243 = vadd.f32 %v239, 0.5
  %v244 = vadd.f32 %v240, 0.5
  %v245 = vadd.f32 %v241, 0.5
  %v246 = vmul.f32 %v226, 0.5
  %v247 = vmul.f32 %v227, 0.5
  %v248 = vmul.f32 %v228, 0.5
  %v249 = vmul.f32 %v229, 0.5
  %v250 = vadd.f32 %v246, 0.5
  %v251 = vadd.f32 %v247, 0.5
  %v252 = vadd.f32 %v248, 0.5
  %v253 = vadd.f32 %v249, 0.5
  %v254 = vld [vmem:[%s1] sm:$0xff]
  %v255 = vld [vmem:[%s1 + $0x8] sm:$0xff]
  %v256 = vld [vmem:[%s1 + $0x10] sm:$0xff]
  %v257 = vld [vmem:[%s1 + $0x18] sm:$0xff]
  %v258 = vmul.f32 %v242, %v254
  %v259 = vmul.f32 %v243, %v255
  %v260 = vmul.f32 %v244, %v256
  %v261 = vmul.f32 %v245, %v257
  %v262 = vmul.f32 %v234, %v222
  %v263 = vmul.f32 %v235, %v223
  %v264 = vmul.f32 %v236, %v224
  %v265 = vmul.f32 %v237, %v225
  %v266 = vadd.f32 %v258, %v262
  %v267 = vadd.f32 %v259, %v263
  %v268 = vadd.f32 %v260, %v264
  %v269 = vadd.f32 %v261, %v265
  %v270 = vtanh.pop %v266
  %v271 = vtanh.pop %v267
  %v272 = vtanh.pop %v268
  %v273 = vtanh.pop %v269
  %v274 = vmul.f32 %v250, %v270
  %v275 = vmul.f32 %v251, %v271
  %v276 = vmul.f32 %v252, %v272
  %v277 = vmul.f32 %v253, %v273
  %278 = vst [vmem:[%s3] sm:$0xff] %v274
  %279 = vst [vmem:[%s3 + $0x8] sm:$0xff] %v275
  %280 = vst [vmem:[%s3 + $0x10] sm:$0xff] %v276
  %281 = vst [vmem:[%s3 + $0x18] sm:$0xff] %v277
  %282 = vst [vmem:[%s3 + $0x20] sm:$0xff] %v266
  %283 = vst [vmem:[%s3 + $0x28] sm:$0xff] %v267
  %284 = vst [vmem:[%s3 + $0x30] sm:$0xff] %v268
  %285 = vst [vmem:[%s3 + $0x38] sm:$0xff] %v269
  // Predicated region
  $region14: #{conv_lstm_cell.1} parent=0 // pred_check
    _
  $region15: #{conv_lstm_cell.1} parent=0 // pred_check_branch
    %287 = sbr.rel (0) target = $region17
  $region16: #{conv_lstm_cell.1} parent=0 // pred_region
    _
  $region17: #{conv_lstm_cell.1} parent=0 // pred_fallthru
    _
  // Predicated region
  $region18: #{conv_lstm_cell.1} parent=0 // pred_check
    _
  $region19: #{conv_lstm_cell.1} parent=0 // pred_check_branch
    %289 = sbr.rel (0) target = $region21
  $region20: #{conv_lstm_cell.1} parent=0 // pred_region
    _
  $region21: #{conv_lstm_cell.1} parent=0 // pred_fallthru
    _

</llo_original>
